<compile_context>
chip_gen: v6e
topology: v6e:2x2x1
jax: 0.10.0
libtpu: 0.0.40
codegen_flags: <defaults>
</compile_context>

<pallas_src>
import jax
import jax.numpy as jnp
from jax.experimental import pallas as pl
from jax.experimental.pallas import tpu as pltpu

STATE_DIM = 8      # state_space
ACTION_DIM = 2     # action_space
H1 = 400           # logical hidden sizes (PyTorch module)
H2 = 300
OUT = 1
H1P = 512          # lane-aligned padded hidden sizes
H2P = 384
MAX_TILE_B = 128   # batch tile for large batches


def _round_up(x, m):
    return (x + m - 1) // m * m


def critic_kernel(s_ref, a_ref, w1s_ref, w1a_ref, b1_ref, w2_ref, b2_ref,
                  w3_ref, b3_ref, o_ref):
    # Layer 1: split-weight matmul replaces concat([state, action]) @ w1.
    # bf16 operands -> MXU native path on v6e/v7x, f32 accumulation.
    s = s_ref[...].astype(jnp.bfloat16)
    a = a_ref[...].astype(jnp.bfloat16)
    h1 = (jnp.dot(s, w1s_ref[...], preferred_element_type=jnp.float32)
          + jnp.dot(a, w1a_ref[...], preferred_element_type=jnp.float32)
          + b1_ref[...])
    h1 = jnp.maximum(h1, 0.0)                                # f32 VPU

    # Layer 2: [tile_b, 512] @ [512, 384] bf16 matmul, f32 bias/ReLU.
    h2 = jnp.dot(h1.astype(jnp.bfloat16), w2_ref[...],
                 preferred_element_type=jnp.float32) + b2_ref[...]
    h2 = jnp.maximum(h2, 0.0)

    # Layer 3 (out_features == 1): avoid an N=1 MXU matmul; VPU multiply +
    # cross-lane (XLU) reduction is effectively free in this kernel.
    q = jnp.sum(h2 * w3_ref[...], axis=-1, keepdims=True) + b3_ref[...]
    o_ref[...] = q.astype(o_ref.dtype)


def init_params(key):
    """PyTorch nn.Linear-style init U(-1/sqrt(fan_in), 1/sqrt(fan_in)).
    Logical (unpadded) shapes, weights stored [in_features, out_features]."""
    dims = [(STATE_DIM + ACTION_DIM, H1), (H1, H2), (H2, OUT)]
    params = []
    for i, (fan_in, fan_out) in enumerate(dims):
        kw, kb = jax.random.split(jax.random.fold_in(key, i))
        bound = 1.0 / jnp.sqrt(jnp.float32(fan_in))
        w = jax.random.uniform(kw, (fan_in, fan_out), jnp.float32, -bound, bound)
        b = jax.random.uniform(kb, (1, fan_out), jnp.float32, -bound, bound)
        params.extend([w, b])
    return tuple(params)


def prepare_params(params):
    """One-time transform: split w1, zero-pad hidden dims to 512/384,
    store the big matmul weights in bf16 (halves weight DMA)."""
    w1, b1, w2, b2, w3, b3 = params
    f32, bf16 = jnp.float32, jnp.bfloat16
    w1p = jnp.zeros((STATE_DIM + ACTION_DIM, H1P), f32).at[:, :H1].set(w1)
    w1s = w1p[:STATE_DIM].astype(bf16)                    # [8, 512]
    w1a = w1p[STATE_DIM:].astype(bf16)                    # [2, 512]
    b1p = jnp.zeros((1, H1P), f32).at[:, :H1].set(b1)     # [1, 512]
    w2p = jnp.zeros((H1P, H2P), f32).at[:H1, :H2].set(w2).astype(bf16)  # [512, 384]
    b2p = jnp.zeros((1, H2P), f32).at[:, :H2].set(b2)     # [1, 384]
    w3p = jnp.zeros((1, H2P), f32).at[:, :H2].set(w3[:, 0])  # row vector, f32
    b3p = b3.reshape(1, 1).astype(f32)                    # [1, 1]
    return (w1s, w1a, b1p, w2p, b2p, w3p, b3p)


def critic_forward(state, action, prepared):
    """state: [B, 8], action: [B, 2] -> q: [B, 1]"""
    w1s, w1a, b1p, w2p, b2p, w3p, b3p = prepared
    state = state.astype(jnp.float32)
    action = action.astype(jnp.float32)
    B = state.shape[0]

    # Batch tiling: single block for small batches, 128-row tiles otherwise.
    tile_b = min(_round_up(max(B, 1), 8), MAX_TILE_B)
    Bp = _round_up(B, tile_b)
    if Bp != B:
        state = jnp.pad(state, ((0, Bp - B), (0, 0)))
        action = jnp.pad(action, ((0, Bp - B), (0, 0)))
    grid = (Bp // tile_b,)

    const = lambda shape: pl.BlockSpec(shape, lambda i: (0,) * len(shape))
    weight_bytes = sum(int(p.size) * p.dtype.itemsize
                       for p in (w1s, w1a, b1p, w2p, b2p, w3p, b3p))
    cost = pl.CostEstimate(
        flops=2 * Bp * ((STATE_DIM + ACTION_DIM) * H1P + H1P * H2P + H2P),
        transcendentals=0,
        bytes_accessed=weight_bytes + Bp * (STATE_DIM + ACTION_DIM) * 4 + Bp * 4,
    )

    q = pl.pallas_call(
        critic_kernel,
        out_shape=jax.ShapeDtypeStruct((Bp, OUT), jnp.float32),
        grid=grid,
        in_specs=[
            pl.BlockSpec((tile_b, STATE_DIM), lambda i: (i, 0)),   # state tile
            pl.BlockSpec((tile_b, ACTION_DIM), lambda i: (i, 0)),  # action tile
            const(w1s.shape), const(w1a.shape), const(b1p.shape),  # weights: constant
            const(w2p.shape), const(b2p.shape),                    # index_map -> no
            const(w3p.shape), const(b3p.shape),                    # per-step re-DMA
        ],
        out_specs=pl.BlockSpec((tile_b, OUT), lambda i: (i, 0)),
        compiler_params=pltpu.CompilerParams(
            dimension_semantics=("parallel",)),   # shards batch tiles across TCs on v7x
        cost_estimate=cost,
    )(state, action, w1s, w1a, b1p, w2p, b2p, w3p, b3p)

    return q[:B] if Bp != B else q


def _reference_forward(state, action, params):
    """Pure-JAX reference with the same bf16-at-the-dots quantization."""
    w1, b1, w2, b2, w3, b3 = params
    bf16 = jnp.bfloat16
    x = jnp.concatenate([state, action], axis=-1).astype(jnp.float32)
    h1 = jax.nn.relu(jnp.dot(x.astype(bf16), w1.astype(bf16),
                             preferred_element_type=jnp.float32) + b1)
    h2 = jax.nn.relu(jnp.dot(h1.astype(bf16), w2.astype(bf16),
                             preferred_element_type=jnp.float32) + b2)
    return jnp.dot(h2, w3, preferred_element_type=jnp.float32) + b3


if __name__ == "__main__":
    key = jax.random.PRNGKey(0)
    k_state, k_action, k_params = jax.random.split(key, 3)

    B = 8
    state = jax.random.normal(k_state, (B, STATE_DIM), jnp.float32)
    action = jax.random.normal(k_action, (B, ACTION_DIM), jnp.float32)
    params = init_params(k_params)
    prepared = prepare_params(params)

    q = critic_forward(state, action, prepared)
    jax.block_until_ready(q)

    q_ref = _reference_forward(state, action, params)
    assert q.shape == (B, 1), q.shape
    assert jnp.allclose(q, q_ref, atol=2e-3, rtol=2e-3), (q, q_ref)

    print("KERNEL_OK")
</pallas_src>

<mosaic_0001>
module attributes {stable_mosaic.version = 11 : i64} {
  func.func @critic_kernel(%arg0: i32, %arg1: memref<8x8xf32, #tpu.memory_space<vmem>>, %arg2: memref<8x2xf32, #tpu.memory_space<vmem>>, %arg3: memref<8x512xbf16, #tpu.memory_space<vmem>>, %arg4: memref<2x512xbf16, #tpu.memory_space<vmem>>, %arg5: memref<1x512xf32, #tpu.memory_space<vmem>>, %arg6: memref<512x384xbf16, #tpu.memory_space<vmem>>, %arg7: memref<1x384xf32, #tpu.memory_space<vmem>>, %arg8: memref<1x384xf32, #tpu.memory_space<vmem>>, %arg9: memref<1x1xf32, #tpu.memory_space<vmem>>, %arg10: memref<8x1xf32, #tpu.memory_space<vmem>>) attributes {dimension_semantics = [#tpu.dimension_semantics<parallel>], iteration_bounds = array<i64: 1>, scalar_prefetch = 0 : i64, scratch_operands = 0 : i64, tpu.core_type = #tpu.core_type<tc>, window_params = [{transform_indices = @transform_0, window_bounds = array<i64: 8, 8>}, {transform_indices = @transform_1, window_bounds = array<i64: 8, 2>}, {pipeline_mode = #tpu.pipeline_mode<synchronous>, transform_indices = @transform_2, window_bounds = array<i64: 8, 512>}, {pipeline_mode = #tpu.pipeline_mode<synchronous>, transform_indices = @transform_3, window_bounds = array<i64: 2, 512>}, {pipeline_mode = #tpu.pipeline_mode<synchronous>, transform_indices = @transform_4, window_bounds = array<i64: 1, 512>}, {pipeline_mode = #tpu.pipeline_mode<synchronous>, transform_indices = @transform_5, window_bounds = array<i64: 512, 384>}, {pipeline_mode = #tpu.pipeline_mode<synchronous>, transform_indices = @transform_6, window_bounds = array<i64: 1, 384>}, {pipeline_mode = #tpu.pipeline_mode<synchronous>, transform_indices = @transform_7, window_bounds = array<i64: 1, 384>}, {pipeline_mode = #tpu.pipeline_mode<synchronous>, transform_indices = @transform_8, window_bounds = array<i64: 1, 1>}, {transform_indices = @transform_9, window_bounds = array<i64: 8, 1>}]} {
    %c0 = arith.constant 0 : index
    %c0_0 = arith.constant 0 : index
    %0 = vector.load %arg1[%c0, %c0_0] : memref<8x8xf32, #tpu.memory_space<vmem>>, vector<8x8xf32>
    %1 = arith.truncf %0 : vector<8x8xf32> to vector<8x8xbf16>
    %c0_1 = arith.constant 0 : index
    %c0_2 = arith.constant 0 : index
    %2 = vector.load %arg2[%c0_1, %c0_2] : memref<8x2xf32, #tpu.memory_space<vmem>>, vector<8x2xf32>
    %3 = arith.truncf %2 : vector<8x2xf32> to vector<8x2xbf16>
    %c0_3 = arith.constant 0 : index
    %c0_4 = arith.constant 0 : index
    %4 = vector.load %arg3[%c0_3, %c0_4] : memref<8x512xbf16, #tpu.memory_space<vmem>>, vector<8x512xbf16>
    %cst = arith.constant dense<0.000000e+00> : vector<8x512xf32>
    %5 = tpu.matmul %1, %4, %cst {dimension_numbers = #tpu.dot_dimension_numbers<[1], [0], [0], [1], [0, 0, 1, 1], [], []>} : vector<8x8xbf16>, vector<8x512xbf16>, vector<8x512xf32> -> vector<8x512xf32>
    %c0_5 = arith.constant 0 : index
    %c0_6 = arith.constant 0 : index
    %6 = vector.load %arg4[%c0_5, %c0_6] : memref<2x512xbf16, #tpu.memory_space<vmem>>, vector<2x512xbf16>
    %cst_7 = arith.constant dense<0.000000e+00> : vector<8x512xf32>
    %7 = tpu.matmul %3, %6, %cst_7 {dimension_numbers = #tpu.dot_dimension_numbers<[1], [0], [0], [1], [0, 0, 1, 1], [], []>} : vector<8x2xbf16>, vector<2x512xbf16>, vector<8x512xf32> -> vector<8x512xf32>
    %8 = arith.addf %5, %7 : vector<8x512xf32>
    %c0_8 = arith.constant 0 : index
    %c0_9 = arith.constant 0 : index
    %9 = vector.load %arg5[%c0_8, %c0_9] : memref<1x512xf32, #tpu.memory_space<vmem>>, vector<1x512xf32>
    %10 = vector.broadcast %9 : vector<1x512xf32> to vector<8x512xf32>
    %11 = arith.addf %8, %10 : vector<8x512xf32>
    %cst_10 = arith.constant 0.000000e+00 : f32
    %12 = vector.broadcast %cst_10 : f32 to vector<8x512xf32>
    %13 = arith.maximumf %11, %12 : vector<8x512xf32>
    %14 = arith.truncf %13 : vector<8x512xf32> to vector<8x512xbf16>
    %c0_11 = arith.constant 0 : index
    %c0_12 = arith.constant 0 : index
    %15 = vector.load %arg6[%c0_11, %c0_12] : memref<512x384xbf16, #tpu.memory_space<vmem>>, vector<512x384xbf16>
    %cst_13 = arith.constant dense<0.000000e+00> : vector<8x384xf32>
    %16 = tpu.matmul %14, %15, %cst_13 {dimension_numbers = #tpu.dot_dimension_numbers<[1], [0], [0], [1], [0, 0, 1, 1], [], []>} : vector<8x512xbf16>, vector<512x384xbf16>, vector<8x384xf32> -> vector<8x384xf32>
    %c0_14 = arith.constant 0 : index
    %c0_15 = arith.constant 0 : index
    %17 = vector.load %arg7[%c0_14, %c0_15] : memref<1x384xf32, #tpu.memory_space<vmem>>, vector<1x384xf32>
    %18 = vector.broadcast %17 : vector<1x384xf32> to vector<8x384xf32>
    %19 = arith.addf %16, %18 : vector<8x384xf32>
    %cst_16 = arith.constant 0.000000e+00 : f32
    %20 = vector.broadcast %cst_16 : f32 to vector<8x384xf32>
    %21 = arith.maximumf %19, %20 : vector<8x384xf32>
    %c0_17 = arith.constant 0 : index
    %c0_18 = arith.constant 0 : index
    %22 = vector.load %arg8[%c0_17, %c0_18] : memref<1x384xf32, #tpu.memory_space<vmem>>, vector<1x384xf32>
    %23 = vector.broadcast %22 : vector<1x384xf32> to vector<8x384xf32>
    %24 = arith.mulf %21, %23 : vector<8x384xf32>
    %cst_19 = arith.constant dense<0.000000e+00> : vector<8xf32>
    %25 = vector.multi_reduction <add>, %24, %cst_19 [1] : vector<8x384xf32> to vector<8xf32>
    %26 = vector.shape_cast %25 : vector<8xf32> to vector<8x1xf32>
    %c0_20 = arith.constant 0 : index
    %c0_21 = arith.constant 0 : index
    %27 = vector.load %arg9[%c0_20, %c0_21] : memref<1x1xf32, #tpu.memory_space<vmem>>, vector<1x1xf32>
    %28 = vector.broadcast %27 : vector<1x1xf32> to vector<8x1xf32>
    %29 = arith.addf %26, %28 : vector<8x1xf32>
    %c0_22 = arith.constant 0 : index
    %c0_23 = arith.constant 0 : index
    %30 = vector.load %arg10[%c0_22, %c0_23] : memref<8x1xf32, #tpu.memory_space<vmem>>, vector<8x1xf32>
    tpu.vector_store %arg10[%c0_22, %c0_23], %29 {strides = array<i32>} : memref<8x1xf32, #tpu.memory_space<vmem>>, vector<8x1xf32>,
    return
  }
  func.func @transform_0(%arg0: i32) -> (i32, i32) {
    %c0_i32 = arith.constant 0 : i32
    %c0_i32_0 = arith.constant 0 : i32
    return %arg0, %c0_i32 : i32, i32
  }
  func.func @transform_1(%arg0: i32) -> (i32, i32) {
    %c0_i32 = arith.constant 0 : i32
    %c0_i32_0 = arith.constant 0 : i32
    return %arg0, %c0_i32 : i32, i32
  }
  func.func @transform_2(%arg0: i32) -> (i32, i32) {
    %c0_i32 = arith.constant 0 : i32
    %c0_i32_0 = arith.constant 0 : i32
    %c0_i32_1 = arith.constant 0 : i32
    return %c0_i32, %c0_i32_0 : i32, i32
  }
  func.func @transform_3(%arg0: i32) -> (i32, i32) {
    %c0_i32 = arith.constant 0 : i32
    %c0_i32_0 = arith.constant 0 : i32
    %c0_i32_1 = arith.constant 0 : i32
    return %c0_i32, %c0_i32_0 : i32, i32
  }
  func.func @transform_4(%arg0: i32) -> (i32, i32) {
    %c0_i32 = arith.constant 0 : i32
    %c0_i32_0 = arith.constant 0 : i32
    %c0_i32_1 = arith.constant 0 : i32
    return %c0_i32, %c0_i32_0 : i32, i32
  }
  func.func @transform_5(%arg0: i32) -> (i32, i32) {
    %c0_i32 = arith.constant 0 : i32
    %c0_i32_0 = arith.constant 0 : i32
    %c0_i32_1 = arith.constant 0 : i32
    return %c0_i32, %c0_i32_0 : i32, i32
  }
  func.func @transform_6(%arg0: i32) -> (i32, i32) {
    %c0_i32 = arith.constant 0 : i32
    %c0_i32_0 = arith.constant 0 : i32
    %c0_i32_1 = arith.constant 0 : i32
    return %c0_i32, %c0_i32_0 : i32, i32
  }
  func.func @transform_7(%arg0: i32) -> (i32, i32) {
    %c0_i32 = arith.constant 0 : i32
    %c0_i32_0 = arith.constant 0 : i32
    %c0_i32_1 = arith.constant 0 : i32
    return %c0_i32, %c0_i32_0 : i32, i32
  }
  func.func @transform_8(%arg0: i32) -> (i32, i32) {
    %c0_i32 = arith.constant 0 : i32
    %c0_i32_0 = arith.constant 0 : i32
    %c0_i32_1 = arith.constant 0 : i32
    return %c0_i32, %c0_i32_0 : i32, i32
  }
  func.func @transform_9(%arg0: i32) -> (i32, i32) {
    %c0_i32 = arith.constant 0 : i32
    %c0_i32_0 = arith.constant 0 : i32
    return %arg0, %c0_i32 : i32, i32
  }
}

</mosaic_0001>

<llo_original>
// kernel: tpu_custom_call.1
$region0: #{tpu_custom_call.1}
  #allocation0 [shape = 'u32[]', space=smem, size = 0x4, offset = 0x4, fixed_abs, tag = 'smem constant byte address 0x4 - core index']
  #allocation1 [shape = 'u32[144,128]{1,0:T(1,128)}', space=vmem, size = 0x12000, scoped, tag = 'internal scratch']
  #allocation2 [shape = 'f32[1,1]{1,0:T(1,128)S(1)}', space=vmem, size = 0x200, scoped, tag = 'scoped memory for tpu_custom_call.1']
  %s0 = inlined_call_operand.vmem [shape: f32[8,8], index: 0, kind: input, shape index: {}]
  %s1 = inlined_call_operand.vmem [shape: f32[8,2], index: 1, kind: input, shape index: {}]
  %s2 = inlined_call_operand.hbm [shape: bf16[8,512], index: 2, kind: input, shape index: {}]
  %s3 = inlined_call_operand.vmem [shape: bf16[2,512], index: 3, kind: input, shape index: {}]
  %s4 = inlined_call_operand.vmem [shape: f32[1,512], index: 4, kind: input, shape index: {}]
  %s5 = inlined_call_operand.hbm [shape: bf16[512,384], index: 5, kind: input, shape index: {}]
  %s6 = inlined_call_operand.vmem [shape: f32[1,384], index: 6, kind: input, shape index: {}]
  %s7 = inlined_call_operand.vmem [shape: f32[1,384], index: 7, kind: input, shape index: {}]
  %s8 = inlined_call_operand.<no memory space> [shape: f32[1,1], index: 8, kind: input, shape index: {}]
  %s9 = inlined_call_operand.vmem [shape: f32[8,1], index: 9, kind: output, shape index: {}]
  %s10 = sld [smem:[#allocation0]]
  $region54: #{tpu_custom_call.1} parent=0
    _
  %s12 = ssub.s32 1, %s10
  %s13 = scalar_select 0, %s12, %s10
  %v14 = vstv %s8
  %15 = vst [vmem:[#allocation2] sm:$0x1] %v14
  $region1: #{tpu_custom_call.1} parent=0
    #allocation3 [shape = 'u8[8192]{0}', space=vmem, size = 0x2000, scoped, tag = 'input window, operand 2, single buffered']
    #allocation4 [shape = 's32[1]{0}', space=sflag, size = 0x4, scoped, tag = 'scoped memory for tpu_custom_call.1']
    #allocation5 [shape = 'u8[393216]{0}', space=vmem, size = 0x60000, scoped, tag = 'input window, operand 5, single buffered']
    #allocation6 [shape = 's32[1]{0}', space=sflag, size = 0x4, scoped, tag = 'scoped memory for tpu_custom_call.1']
    %16 = vsyncpa [#allocation4], 0
    %17 = vsyncpa [#allocation6], 0
    // Predicated region
    $region2: #{tpu_custom_call.1} parent=1 // pred_check
      _
    $region3: #{tpu_custom_call.1} parent=1 // pred_check_branch
      %19 = sbr.rel (0) target = $region5
    $region4: #{tpu_custom_call.1} parent=1 // pred_region
      _
    $region5: #{tpu_custom_call.1} parent=1 // pred_fallthru
      _
    // Predicated region
    $region6: #{tpu_custom_call.1} parent=1 // pred_check
      _
    $region7: #{tpu_custom_call.1} parent=1 // pred_check_branch
      %21 = sbr.rel (0) target = $region9
    $region8: #{tpu_custom_call.1} parent=1 // pred_region
      _
    $region9: #{tpu_custom_call.1} parent=1 // pred_fallthru
      _
    // Predicated region
    $region10: #{tpu_custom_call.1} parent=1 // pred_check
      _
    $region11: #{tpu_custom_call.1} parent=1 // pred_check_branch
      %23 = sbr.rel (0) target = $region13
    $region12: #{tpu_custom_call.1} parent=1 // pred_region
      %s25 = ssub.s32 256, 256
      %26 = vsyncadd [#allocation4], %s25
      %s28 = sshll.u32 [#allocation3], 4
      %s29 = int_to_ptr.vmem [resolvable:$true] %s28
      %31 = dma.hbm_to_vmem [thread:$0]  %s2, 256, %s29, [#allocation4]
    $region13: #{tpu_custom_call.1} parent=1 // pred_fallthru
      _
    // Predicated region
    $region14: #{tpu_custom_call.1} parent=1 // pred_check
      _
    $region15: #{tpu_custom_call.1} parent=1 // pred_check_branch
      %33 = sbr.rel (0) target = $region17
    $region16: #{tpu_custom_call.1} parent=1 // pred_region
      _
    $region17: #{tpu_custom_call.1} parent=1 // pred_fallthru
      _
    // Predicated region
    $region18: #{tpu_custom_call.1} parent=1 // pred_check
      _
    $region19: #{tpu_custom_call.1} parent=1 // pred_check_branch
      %35 = sbr.rel (0) target = $region21
    $region20: #{tpu_custom_call.1} parent=1 // pred_region
      _
    $region21: #{tpu_custom_call.1} parent=1 // pred_fallthru
      _
    // Predicated region
    $region22: #{tpu_custom_call.1} parent=1 // pred_check
      _
    $region23: #{tpu_custom_call.1} parent=1 // pred_check_branch
      %37 = sbr.rel (0) target = $region25
    $region24: #{tpu_custom_call.1} parent=1 // pred_region
      %s39 = ssub.s32 12288, 12288
      %40 = vsyncadd [#allocation6], %s39
      %s41 = sshll.u32 [#allocation5], 4
      %s42 = int_to_ptr.vmem [resolvable:$true] %s41
      %47 = dma.hbm_to_vmem [thread:$0]  %s5, 12288, %s42, [#allocation6], 192, 192, 12
    $region25: #{tpu_custom_call.1} parent=1 // pred_fallthru
      _
    // Predicated region
    $region26: #{tpu_custom_call.1} parent=1 // pred_check
      _
    $region27: #{tpu_custom_call.1} parent=1 // pred_check_branch
      %49 = sbr.rel (0) target = $region29
    $region28: #{tpu_custom_call.1} parent=1 // pred_region
      _
    $region29: #{tpu_custom_call.1} parent=1 // pred_fallthru
      _
    // Predicated region
    $region30: #{tpu_custom_call.1} parent=1 // pred_check
      _
    $region31: #{tpu_custom_call.1} parent=1 // pred_check_branch
      %51 = sbr.rel (0) target = $region33
    $region32: #{tpu_custom_call.1} parent=1 // pred_region
      _
    $region33: #{tpu_custom_call.1} parent=1 // pred_fallthru
      _
    // Predicated region
    $region34: #{tpu_custom_call.1} parent=1 // pred_check
      _
    $region35: #{tpu_custom_call.1} parent=1 // pred_check_branch
      %53 = sbr.rel (0) target = $region37
    $region36: #{tpu_custom_call.1} parent=1 // pred_region
      _
    $region37: #{tpu_custom_call.1} parent=1 // pred_fallthru
      _
    // Predicated region
    $region38: #{tpu_custom_call.1} parent=1 // pred_check
      _
    $region39: #{tpu_custom_call.1} parent=1 // pred_check_branch
      %55 = sbr.rel (0) target = $region41
    $region40: #{tpu_custom_call.1} parent=1 // pred_region
      %56 = dma.done [#allocation4], 256
    $region41: #{tpu_custom_call.1} parent=1 // pred_fallthru
      _
    // Predicated region
    $region42: #{tpu_custom_call.1} parent=1 // pred_check
      _
    $region43: #{tpu_custom_call.1} parent=1 // pred_check_branch
      %58 = sbr.rel (0) target = $region45
    $region44: #{tpu_custom_call.1} parent=1 // pred_region
      %59 = dma.done [#allocation6], 12288
    $region45: #{tpu_custom_call.1} parent=1 // pred_fallthru
      _
    %v61 = vld [vmem:[%s0] sm:$0xff]
    %v62 = vpack.c.bf16 %v61, %v61
    %v63 = vld [vmem:[%s1] sm:$0xff]
    %v64 = vpack.c.bf16 %v63, %v63
    %v65 = vld [vmem:[#allocation3] sm:$0xff]
    %v66 = vld [vmem:[#allocation3 + $0x8] sm:$0xff]
    %v67 = vld [vmem:[%s3] sm:$0xf]
    %v70 = vunpack.c.l.s4 1966171168
    %v71 = vunpack.c.0.s8 %v70
    %v72 = vlaneseq
    %v73 = vshrl.u32 %v72, 7
    %v74 = vsub.s32 %v71, %v73
    %v75 = vrot.slane %v67, %v74
    %v76 = vcombine.high %v75, %v75
    %v78 = vunpack.c.l.s4 1966171168
    %v79 = vunpack.c.0.s8 %v78
    %v80 = vlaneseq
    %v81 = vshrl.u32 %v80, 7
    %v82 = vsub.s32 %v79, %v81
    %v83 = vrot.slane %v75, %v82
    %v85 = vunpack.c.l.s4 1966171168
    %v86 = vunpack.c.0.s8 %v85
    %v87 = vlaneseq
    %v88 = vshrl.u32 %v87, 7
    %v89 = vsub.s32 %v86, %v88
    %v90 = vrot.slane %v76, %v89
    %v91 = vcombine.high %v83, %v83
    %v92 = vcombine.high %v90, %v90
    %vm93 = vcmask 15360
    %v95 = vsel %vm93, %v64, 0
    %vm97 = vcmask 1040384
    %v99 = vsel %vm97, %v83, 0
    %v102 = vsel %vm97, %v90, 0
    %v105 = vsel %vm97, %v91, 0
    %v108 = vsel %vm97, %v92, 0
    %110 = vmatprep.subr.bf16.mxu0 0
    %111 = vmatpush1.bf16.msra.mxu0 0
    %112 = vmatprep.subr.bf16.mxu0 0
    %113 = vmatpush1.bf16.msra.mxu0 0
    %114 = vmatprep.subr.bf16.mxu0 0
    %115 = vmatpush1.bf16.msra.mxu0 0
    %116 = vmatprep.subr.bf16.mxu0 0
    %117 = vmatpush1.bf16.msra.mxu0 0
    %118 = vmatprep.subr.bf16.mxu0 0
    %119 = vmatpush1.bf16.msra.mxu0 0
    %120 = vmatprep.subr.bf16.mxu0 0
    %121 = vmatpush1.bf16.msra.mxu0 0
    %122 = vmatprep.subr.bf16.mxu0 0
    %123 = vmatpush1.bf16.msra.mxu0 0
    %124 = vmatprep.subr.bf16.mxu0 %v102
    %125 = vmatpush1.bf16.msra.mxu0 %v99
    %126 = vmatprep.subr.bf16.mxu0 0
    %127 = vmatpush2.bf16.msra.mxu0 0
    %128 = vmatprep.subr.bf16.mxu0 0
    %129 = vmatpush2.bf16.msra.mxu0 0
    %130 = vmatprep.subr.bf16.mxu0 0
    %131 = vmatpush2.bf16.msra.mxu0 0
    %132 = vmatprep.subr.bf16.mxu0 0
    %133 = vmatpush2.bf16.msra.mxu0 0
    %134 = vmatprep.subr.bf16.mxu0 0
    %135 = vmatpush2.bf16.msra.mxu0 0
    %136 = vmatprep.subr.bf16.mxu0 0
    %137 = vmatpush2.bf16.msra.mxu0 0
    %138 = vmatprep.subr.bf16.mxu0 0
    %139 = vmatpush2.bf16.msra.mxu0 0
    %140 = vmatprep.subr.bf16.mxu0 0
    %141 = vmatpush2.bf16.msra.mxu0 0
    %142 = vmatprep.mubr.bf16.mxu0 0
    %143 = vmatmul.mubr.bf16.gmra.mxu0 %v95
    %v144 = vpop.f32.mrf.mxu0
    %v145 = vadd.f32 0.0, %v144
    %v146 = vpop.f32.mrf.mxu0
    %v147 = vadd.f32 0.0, %v146
    %v148 = vpop.f32.mrf.mxu0
    %v149 = vpop.f32.mrf.mxu0
    %150 = vdwg.mxu0
    %151 = vmatprep.subr.bf16.mxu0 0
    %152 = vmatpush1.bf16.msra.mxu0 0
    %153 = vmatprep.subr.bf16.mxu0 0
    %154 = vmatpush1.bf16.msra.mxu0 0
    %155 = vmatprep.subr.bf16.mxu0 0
    %156 = vmatpush1.bf16.msra.mxu0 0
    %157 = vmatprep.subr.bf16.mxu0 0
    %158 = vmatpush1.bf16.msra.mxu0 0
    %159 = vmatprep.subr.bf16.mxu0 0
    %160 = vmatpush1.bf16.msra.mxu0 0
    %161 = vmatprep.subr.bf16.mxu0 0
    %162 = vmatpush1.bf16.msra.mxu0 0
    %163 = vmatprep.subr.bf16.mxu0 0
    %164 = vmatpush1.bf16.msra.mxu0 0
    %165 = vmatprep.subr.bf16.mxu0 %v108
    %166 = vmatpush1.bf16.msra.mxu0 %v105
    %167 = vmatprep.subr.bf16.mxu0 0
    %168 = vmatpush2.bf16.msra.mxu0 0
    %169 = vmatprep.subr.bf16.mxu0 0
    %170 = vmatpush2.bf16.msra.mxu0 0
    %171 = vmatprep.subr.bf16.mxu0 0
    %172 = vmatpush2.bf16.msra.mxu0 0
    %173 = vmatprep.subr.bf16.mxu0 0
    %174 = vmatpush2.bf16.msra.mxu0 0
    %175 = vmatprep.subr.bf16.mxu0 0
    %176 = vmatpush2.bf16.msra.mxu0 0
    %177 = vmatprep.subr.bf16.mxu0 0
    %178 = vmatpush2.bf16.msra.mxu0 0
    %179 = vmatprep.subr.bf16.mxu0 0
    %180 = vmatpush2.bf16.msra.mxu0 0
    %181 = vmatprep.subr.bf16.mxu0 0
    %182 = vmatpush2.bf16.msra.mxu0 0
    %183 = vmatprep.mubr.bf16.mxu0 0
    %184 = vmatmul.mubr.bf16.gmra.mxu0 %v95
    %v185 = vpop.f32.mrf.mxu0
    %v186 = vadd.f32 0.0, %v185
    %v187 = vpop.f32.mrf.mxu0
    %v188 = vadd.f32 0.0, %v187
    %v189 = vpop.f32.mrf.mxu0
    %v190 = vpop.f32.mrf.mxu0
    %191 = vdwg.mxu0
    %v194 = vunpack.c.l.b16 %v65
    %v195 = vunpack.c.h.b16 %v65
    %v196 = vunpack.c.l.b16 %v66
    %v197 = vunpack.c.h.b16 %v66
    %v198 = vpack.c.b16 %v194, %v194
    %v199 = vpack.c.b16 %v195, %v195
    %v200 = vpack.c.b16 %v196, %v196
    %v201 = vpack.c.b16 %v197, %v197
    %vm202 = vcmask 64512
    %v204 = vsel %vm202, %v62, 0
    %vm206 = vcmask 1043456
    %v208 = vsel %vm206, %v198, 0
    %v211 = vsel %vm206, %v199, 0
    %v214 = vsel %vm206, %v200, 0
    %v217 = vsel %vm206, %v201, 0
    %219 = vmatprep.subr.bf16.mxu0 0
    %220 = vmatpush1.bf16.msra.mxu0 0
    %221 = vmatprep.subr.bf16.mxu0 0
    %222 = vmatpush1.bf16.msra.mxu0 0
    %223 = vmatprep.subr.bf16.mxu0 0
    %224 = vmatpush1.bf16.msra.mxu0 0
    %225 = vmatprep.subr.bf16.mxu0 0
    %226 = vmatpush1.bf16.msra.mxu0 0
    %227 = vmatprep.subr.bf16.mxu0 0
    %228 = vmatpush1.bf16.msra.mxu0 0
    %229 = vmatprep.subr.bf16.mxu0 0
    %230 = vmatpush1.bf16.msra.mxu0 0
    %231 = vmatprep.subr.bf16.mxu0 0
    %232 = vmatpush1.bf16.msra.mxu0 0
    %233 = vmatprep.subr.bf16.mxu0 %v211
    %234 = vmatpush1.bf16.msra.mxu0 %v208
    %235 = vmatprep.subr.bf16.mxu0 0
    %236 = vmatpush2.bf16.msra.mxu0 0
    %237 = vmatprep.subr.bf16.mxu0 0
    %238 = vmatpush2.bf16.msra.mxu0 0
    %239 = vmatprep.subr.bf16.mxu0 0
    %240 = vmatpush2.bf16.msra.mxu0 0
    %241 = vmatprep.subr.bf16.mxu0 0
    %242 = vmatpush2.bf16.msra.mxu0 0
    %243 = vmatprep.subr.bf16.mxu0 0
    %244 = vmatpush2.bf16.msra.mxu0 0
    %245 = vmatprep.subr.bf16.mxu0 0
    %246 = vmatpush2.bf16.msra.mxu0 0
    %247 = vmatprep.subr.bf16.mxu0 0
    %248 = vmatpush2.bf16.msra.mxu0 0
    %249 = vmatprep.subr.bf16.mxu0 0
    %250 = vmatpush2.bf16.msra.mxu0 0
    %251 = vmatprep.mubr.bf16.mxu0 0
    %252 = vmatmul.mubr.bf16.gmra.mxu0 %v204
    %v253 = vpop.f32.mrf.mxu0
    %v254 = vadd.f32 %v145, %v253
    %v255 = vpop.f32.mrf.mxu0
    %v256 = vadd.f32 %v147, %v255
    %v257 = vpop.f32.mrf.mxu0
    %v258 = vpop.f32.mrf.mxu0
    %259 = vdwg.mxu0
    %260 = vmatprep.subr.bf16.mxu0 0
    %261 = vmatpush1.bf16.msra.mxu0 0
    %262 = vmatprep.subr.bf16.mxu0 0
    %263 = vmatpush1.bf16.msra.mxu0 0
    %264 = vmatprep.subr.bf16.mxu0 0
    %265 = vmatpush1.bf16.msra.mxu0 0
    %266 = vmatprep.subr.bf16.mxu0 0
    %267 = vmatpush1.bf16.msra.mxu0 0
    %268 = vmatprep.subr.bf16.mxu0 0
    %269 = vmatpush1.bf16.msra.mxu0 0
    %270 = vmatprep.subr.bf16.mxu0 0
    %271 = vmatpush1.bf16.msra.mxu0 0
    %272 = vmatprep.subr.bf16.mxu0 0
    %273 = vmatpush1.bf16.msra.mxu0 0
    %274 = vmatprep.subr.bf16.mxu0 %v217
    %275 = vmatpush1.bf16.msra.mxu0 %v214
    %276 = vmatprep.subr.bf16.mxu0 0
    %277 = vmatpush2.bf16.msra.mxu0 0
    %278 = vmatprep.subr.bf16.mxu0 0
    %279 = vmatpush2.bf16.msra.mxu0 0
    %280 = vmatprep.subr.bf16.mxu0 0
    %281 = vmatpush2.bf16.msra.mxu0 0
    %282 = vmatprep.subr.bf16.mxu0 0
    %283 = vmatpush2.bf16.msra.mxu0 0
    %284 = vmatprep.subr.bf16.mxu0 0
    %285 = vmatpush2.bf16.msra.mxu0 0
    %286 = vmatprep.subr.bf16.mxu0 0
    %287 = vmatpush2.bf16.msra.mxu0 0
    %288 = vmatprep.subr.bf16.mxu0 0
    %289 = vmatpush2.bf16.msra.mxu0 0
    %290 = vmatprep.subr.bf16.mxu0 0
    %291 = vmatpush2.bf16.msra.mxu0 0
    %292 = vmatprep.mubr.bf16.mxu0 0
    %293 = vmatmul.mubr.bf16.gmra.mxu0 %v204
    %v294 = vpop.f32.mrf.mxu0
    %v295 = vadd.f32 %v186, %v294
    %v296 = vpop.f32.mrf.mxu0
    %v297 = vadd.f32 %v188, %v296
    %v298 = vpop.f32.mrf.mxu0
    %v299 = vpop.f32.mrf.mxu0
    %300 = vdwg.mxu0
    %v301 = vld [vmem:[%s4] sm:$0xf]
    %v303 = vlaneseq
    %v304 = vshrl.u32 %v303, 7
    %v305 = vsub.s32 0, %v304
    %v306 = vrot.slane %v301, %v305
    %v307 = vlaneseq
    %v308 = vshrl.u32 %v307, 7
    %v309 = vsub.s32 1, %v308
    %v310 = vrot.slane %v301, %v309
    %v311 = vlaneseq
    %v312 = vshrl.u32 %v311, 7
    %v313 = vsub.s32 2, %v312
    %v314 = vrot.slane %v301, %v313
    %v315 = vlaneseq
    %v316 = vshrl.u32 %v315, 7
    %v317 = vsub.s32 3, %v316
    %v318 = vrot.slane %v301, %v317
    %v323 = vadd.f32 %v254, %v306
    %v324 = vadd.f32 %v256, %v310
    %v325 = vadd.f32 %v295, %v314
    %v326 = vadd.f32 %v297, %v318
    %v327 = vmax.f32 %v323, 0.0
    %v328 = vmax.f32 %v324, 0.0
    %v329 = vmax.f32 %v325, 0.0
    %v330 = vmax.f32 %v326, 0.0
    %v331 = vpack.c.bf16 %v327, %v327
    %v332 = vpack.c.bf16 %v328, %v328
    %v333 = vpack.c.bf16 %v329, %v329
    %v334 = vpack.c.bf16 %v330, %v330
    %v335 = vld [vmem:[#allocation5] sm:$0xff]
    %v336 = vld [vmem:[#allocation5 + $0x8] sm:$0xf]
    %v337 = vld [vmem:[#allocation5 + $0xc] sm:$0xff]
    %v338 = vld [vmem:[#allocation5 + $0x14] sm:$0xf]
    %v339 = vld [vmem:[#allocation5 + $0x18] sm:$0xff]
    %v340 = vld [vmem:[#allocation5 + $0x20] sm:$0xf]
    %v341 = vld [vmem:[#allocation5 + $0x24] sm:$0xff]
    %v342 = vld [vmem:[#allocation5 + $0x2c] sm:$0xf]
    %v343 = vld [vmem:[#allocation5 + $0x30] sm:$0xff]
    %v344 = vld [vmem:[#allocation5 + $0x38] sm:$0xf]
    %v345 = vld [vmem:[#allocation5 + $0x3c] sm:$0xff]
    %v346 = vld [vmem:[#allocation5 + $0x44] sm:$0xf]
    %v347 = vld [vmem:[#allocation5 + $0x48] sm:$0xff]
    %v348 = vld [vmem:[#allocation5 + $0x50] sm:$0xf]
    %v349 = vld [vmem:[#allocation5 + $0x54] sm:$0xff]
    %v350 = vld [vmem:[#allocation5 + $0x5c] sm:$0xf]
    %v351 = vld [vmem:[#allocation5 + $0x60] sm:$0xff]
    %v352 = vld [vmem:[#allocation5 + $0x68] sm:$0xf]
    %v353 = vld [vmem:[#allocation5 + $0x6c] sm:$0xff]
    %v354 = vld [vmem:[#allocation5 + $0x74] sm:$0xf]
    %v355 = vld [vmem:[#allocation5 + $0x78] sm:$0xff]
    %v356 = vld [vmem:[#allocation5 + $0x80] sm:$0xf]
    %v357 = vld [vmem:[#allocation5 + $0x84] sm:$0xff]
    %v358 = vld [vmem:[#allocation5 + $0x8c] sm:$0xf]
    %v359 = vld [vmem:[#allocation5 + $0x90] sm:$0xff]
    %v360 = vld [vmem:[#allocation5 + $0x98] sm:$0xf]
    %v361 = vld [vmem:[#allocation5 + $0x9c] sm:$0xff]
    %v362 = vld [vmem:[#allocation5 + $0xa4] sm:$0xf]
    %v363 = vld [vmem:[#allocation5 + $0xa8] sm:$0xff]
    %v364 = vld [vmem:[#allocation5 + $0xb0] sm:$0xf]
    %v365 = vld [vmem:[#allocation5 + $0xb4] sm:$0xff]
    %v366 = vld [vmem:[#allocation5 + $0xbc] sm:$0xf]
    %v367 = vld [vmem:[#allocation5 + $0xc0] sm:$0xff]
    %v368 = vld [vmem:[#allocation5 + $0xc8] sm:$0xf]
    %v369 = vld [vmem:[#allocation5 + $0xcc] sm:$0xff]
    %v370 = vld [vmem:[#allocation5 + $0xd4] sm:$0xf]
    %v371 = vld [vmem:[#allocation5 + $0xd8] sm:$0xff]
    %v372 = vld [vmem:[#allocation5 + $0xe0] sm:$0xf]
    %v373 = vld [vmem:[#allocation5 + $0xe4] sm:$0xff]
    %v374 = vld [vmem:[#allocation5 + $0xec] sm:$0xf]
    %v375 = vld [vmem:[#allocation5 + $0xf0] sm:$0xff]
    %v376 = vld [vmem:[#allocation5 + $0xf8] sm:$0xf]
    %v377 = vld [vmem:[#allocation5 + $0xfc] sm:$0xff]
    %v378 = vld [vmem:[#allocation5 + $0x104] sm:$0xf]
    %v379 = vld [vmem:[#allocation5 + $0x108] sm:$0xff]
    %v380 = vld [vmem:[#allocation5 + $0x110] sm:$0xf]
    %v381 = vld [vmem:[#allocation5 + $0x114] sm:$0xff]
    %v382 = vld [vmem:[#allocation5 + $0x11c] sm:$0xf]
    %v383 = vld [vmem:[#allocation5 + $0x120] sm:$0xff]
    %v384 = vld [vmem:[#allocation5 + $0x128] sm:$0xf]
    %v385 = vld [vmem:[#allocation5 + $0x12c] sm:$0xff]
    %v386 = vld [vmem:[#allocation5 + $0x134] sm:$0xf]
    %v387 = vld [vmem:[#allocation5 + $0x138] sm:$0xff]
    %v388 = vld [vmem:[#allocation5 + $0x140] sm:$0xf]
    %v389 = vld [vmem:[#allocation5 + $0x144] sm:$0xff]
    %v390 = vld [vmem:[#allocation5 + $0x14c] sm:$0xf]
    %v391 = vld [vmem:[#allocation5 + $0x150] sm:$0xff]
    %v392 = vld [vmem:[#allocation5 + $0x158] sm:$0xf]
    %v393 = vld [vmem:[#allocation5 + $0x15c] sm:$0xff]
    %v394 = vld [vmem:[#allocation5 + $0x164] sm:$0xf]
    %v395 = vld [vmem:[#allocation5 + $0x168] sm:$0xff]
    %v396 = vld [vmem:[#allocation5 + $0x170] sm:$0xf]
    %v397 = vld [vmem:[#allocation5 + $0x174] sm:$0xff]
    %v398 = vld [vmem:[#allocation5 + $0x17c] sm:$0xf]
    %v399 = vld [vmem:[#allocation5 + $0x180] sm:$0xff]
    %v400 = vld [vmem:[#allocation5 + $0x188] sm:$0xf]
    %v401 = vld [vmem:[#allocation5 + $0x18c] sm:$0xff]
    %v402 = vld [vmem:[#allocation5 + $0x194] sm:$0xf]
    %v403 = vld [vmem:[#allocation5 + $0x198] sm:$0xff]
    %v404 = vld [vmem:[#allocation5 + $0x1a0] sm:$0xf]
    %v405 = vld [vmem:[#allocation5 + $0x1a4] sm:$0xff]
    %v406 = vld [vmem:[#allocation5 + $0x1ac] sm:$0xf]
    %v407 = vld [vmem:[#allocation5 + $0x1b0] sm:$0xff]
    %v408 = vld [vmem:[#allocation5 + $0x1b8] sm:$0xf]
    %v409 = vld [vmem:[#allocation5 + $0x1bc] sm:$0xff]
    %v410 = vld [vmem:[#allocation5 + $0x1c4] sm:$0xf]
    %v411 = vld [vmem:[#allocation5 + $0x1c8] sm:$0xff]
    %v412 = vld [vmem:[#allocation5 + $0x1d0] sm:$0xf]
    %v413 = vld [vmem:[#allocation5 + $0x1d4] sm:$0xff]
    %v414 = vld [vmem:[#allocation5 + $0x1dc] sm:$0xf]
    %v415 = vld [vmem:[#allocation5 + $0x1e0] sm:$0xff]
    %v416 = vld [vmem:[#allocation5 + $0x1e8] sm:$0xf]
    %v417 = vld [vmem:[#allocation5 + $0x1ec] sm:$0xff]
    %v418 = vld [vmem:[#allocation5 + $0x1f4] sm:$0xf]
    %v419 = vld [vmem:[#allocation5 + $0x1f8] sm:$0xff]
    %v420 = vld [vmem:[#allocation5 + $0x200] sm:$0xf]
    %v421 = vld [vmem:[#allocation5 + $0x204] sm:$0xff]
    %v422 = vld [vmem:[#allocation5 + $0x20c] sm:$0xf]
    %v423 = vld [vmem:[#allocation5 + $0x210] sm:$0xff]
    %v424 = vld [vmem:[#allocation5 + $0x218] sm:$0xf]
    %v425 = vld [vmem:[#allocation5 + $0x21c] sm:$0xff]
    %v426 = vld [vmem:[#allocation5 + $0x224] sm:$0xf]
    %v427 = vld [vmem:[#allocation5 + $0x228] sm:$0xff]
    %v428 = vld [vmem:[#allocation5 + $0x230] sm:$0xf]
    %v429 = vld [vmem:[#allocation5 + $0x234] sm:$0xff]
    %v430 = vld [vmem:[#allocation5 + $0x23c] sm:$0xf]
    %v431 = vld [vmem:[#allocation5 + $0x240] sm:$0xff]
    %v432 = vld [vmem:[#allocation5 + $0x248] sm:$0xf]
    %v433 = vld [vmem:[#allocation5 + $0x24c] sm:$0xff]
    %v434 = vld [vmem:[#allocation5 + $0x254] sm:$0xf]
    %v435 = vld [vmem:[#allocation5 + $0x258] sm:$0xff]
    %v436 = vld [vmem:[#allocation5 + $0x260] sm:$0xf]
    %v437 = vld [vmem:[#allocation5 + $0x264] sm:$0xff]
    %v438 = vld [vmem:[#allocation5 + $0x26c] sm:$0xf]
    %v439 = vld [vmem:[#allocation5 + $0x270] sm:$0xff]
    %v440 = vld [vmem:[#allocation5 + $0x278] sm:$0xf]
    %v441 = vld [vmem:[#allocation5 + $0x27c] sm:$0xff]
    %v442 = vld [vmem:[#allocation5 + $0x284] sm:$0xf]
    %v443 = vld [vmem:[#allocation5 + $0x288] sm:$0xff]
    %v444 = vld [vmem:[#allocation5 + $0x290] sm:$0xf]
    %v445 = vld [vmem:[#allocation5 + $0x294] sm:$0xff]
    %v446 = vld [vmem:[#allocation5 + $0x29c] sm:$0xf]
    %v447 = vld [vmem:[#allocation5 + $0x2a0] sm:$0xff]
    %v448 = vld [vmem:[#allocation5 + $0x2a8] sm:$0xf]
    %v449 = vld [vmem:[#allocation5 + $0x2ac] sm:$0xff]
    %v450 = vld [vmem:[#allocation5 + $0x2b4] sm:$0xf]
    %v451 = vld [vmem:[#allocation5 + $0x2b8] sm:$0xff]
    %v452 = vld [vmem:[#allocation5 + $0x2c0] sm:$0xf]
    %v453 = vld [vmem:[#allocation5 + $0x2c4] sm:$0xff]
    %v454 = vld [vmem:[#allocation5 + $0x2cc] sm:$0xf]
    %v455 = vld [vmem:[#allocation5 + $0x2d0] sm:$0xff]
    %v456 = vld [vmem:[#allocation5 + $0x2d8] sm:$0xf]
    %v457 = vld [vmem:[#allocation5 + $0x2dc] sm:$0xff]
    %v458 = vld [vmem:[#allocation5 + $0x2e4] sm:$0xf]
    %v459 = vld [vmem:[#allocation5 + $0x2e8] sm:$0xff]
    %v460 = vld [vmem:[#allocation5 + $0x2f0] sm:$0xf]
    %v461 = vld [vmem:[#allocation5 + $0x2f4] sm:$0xff]
    %v462 = vld [vmem:[#allocation5 + $0x2fc] sm:$0xf]
    %v463 = vld [vmem:[%s6] sm:$0x7]
    %v465 = vlaneseq
    %v466 = vshrl.u32 %v465, 7
    %v467 = vsub.s32 0, %v466
    %v468 = vrot.slane %v463, %v467
    %v469 = vlaneseq
    %v470 = vshrl.u32 %v469, 7
    %v471 = vsub.s32 1, %v470
    %v472 = vrot.slane %v463, %v471
    %v473 = vlaneseq
    %v474 = vshrl.u32 %v473, 7
    %v475 = vsub.s32 2, %v474
    %v476 = vrot.slane %v463, %v475
    %v608 = vunpack.c.l.b16 %v335
    %v609 = vunpack.c.h.b16 %v335
    %v610 = vunpack.c.l.b16 %v336
    %v611 = vunpack.c.l.b16 %v337
    %v612 = vunpack.c.h.b16 %v337
    %v613 = vunpack.c.l.b16 %v338
    %v614 = vunpack.c.l.b16 %v339
    %v615 = vunpack.c.h.b16 %v339
    %v616 = vunpack.c.l.b16 %v340
    %v617 = vunpack.c.l.b16 %v341
    %v618 = vunpack.c.h.b16 %v341
    %v619 = vunpack.c.l.b16 %v342
    %v620 = vunpack.c.l.b16 %v343
    %v621 = vunpack.c.h.b16 %v343
    %v622 = vunpack.c.l.b16 %v344
    %v623 = vunpack.c.l.b16 %v345
    %v624 = vunpack.c.h.b16 %v345
    %v625 = vunpack.c.l.b16 %v346
    %v626 = vunpack.c.l.b16 %v347
    %v627 = vunpack.c.h.b16 %v347
    %v628 = vunpack.c.l.b16 %v348
    %v629 = vunpack.c.l.b16 %v349
    %v630 = vunpack.c.h.b16 %v349
    %v631 = vunpack.c.l.b16 %v350
    %v632 = vunpack.c.l.b16 %v351
    %v633 = vunpack.c.h.b16 %v351
    %v634 = vunpack.c.l.b16 %v352
    %v635 = vunpack.c.l.b16 %v353
    %v636 = vunpack.c.h.b16 %v353
    %v637 = vunpack.c.l.b16 %v354
    %v638 = vunpack.c.l.b16 %v355
    %v639 = vunpack.c.h.b16 %v355
    %v640 = vunpack.c.l.b16 %v356
    %v641 = vunpack.c.l.b16 %v357
    %v642 = vunpack.c.h.b16 %v357
    %v643 = vunpack.c.l.b16 %v358
    %v644 = vunpack.c.l.b16 %v359
    %v645 = vunpack.c.h.b16 %v359
    %v646 = vunpack.c.l.b16 %v360
    %v647 = vunpack.c.l.b16 %v361
    %v648 = vunpack.c.h.b16 %v361
    %v649 = vunpack.c.l.b16 %v362
    %v650 = vunpack.c.l.b16 %v363
    %v651 = vunpack.c.h.b16 %v363
    %v652 = vunpack.c.l.b16 %v364
    %v653 = vunpack.c.l.b16 %v365
    %v654 = vunpack.c.h.b16 %v365
    %v655 = vunpack.c.l.b16 %v366
    %v656 = vunpack.c.l.b16 %v367
    %v657 = vunpack.c.h.b16 %v367
    %v658 = vunpack.c.l.b16 %v368
    %v659 = vunpack.c.l.b16 %v369
    %v660 = vunpack.c.h.b16 %v369
    %v661 = vunpack.c.l.b16 %v370
    %v662 = vunpack.c.l.b16 %v371
    %v663 = vunpack.c.h.b16 %v371
    %v664 = vunpack.c.l.b16 %v372
    %v665 = vunpack.c.l.b16 %v373
    %v666 = vunpack.c.h.b16 %v373
    %v667 = vunpack.c.l.b16 %v374
    %v668 = vunpack.c.l.b16 %v375
    %v669 = vunpack.c.h.b16 %v375
    %v670 = vunpack.c.l.b16 %v376
    %v671 = vunpack.c.l.b16 %v377
    %v672 = vunpack.c.h.b16 %v377
    %v673 = vunpack.c.l.b16 %v378
    %v674 = vunpack.c.l.b16 %v379
    %v675 = vunpack.c.h.b16 %v379
    %v676 = vunpack.c.l.b16 %v380
    %v677 = vunpack.c.l.b16 %v381
    %v678 = vunpack.c.h.b16 %v381
    %v679 = vunpack.c.l.b16 %v382
    %v680 = vunpack.c.l.b16 %v383
    %v681 = vunpack.c.h.b16 %v383
    %v682 = vunpack.c.l.b16 %v384
    %v683 = vunpack.c.l.b16 %v385
    %v684 = vunpack.c.h.b16 %v385
    %v685 = vunpack.c.l.b16 %v386
    %v686 = vunpack.c.l.b16 %v387
    %v687 = vunpack.c.h.b16 %v387
    %v688 = vunpack.c.l.b16 %v388
    %v689 = vunpack.c.l.b16 %v389
    %v690 = vunpack.c.h.b16 %v389
    %v691 = vunpack.c.l.b16 %v390
    %v692 = vunpack.c.l.b16 %v391
    %v693 = vunpack.c.h.b16 %v391
    %v694 = vunpack.c.l.b16 %v392
    %v695 = vunpack.c.l.b16 %v393
    %v696 = vunpack.c.h.b16 %v393
    %v697 = vunpack.c.l.b16 %v394
    %v698 = vunpack.c.l.b16 %v395
    %v699 = vunpack.c.h.b16 %v395
    %v700 = vunpack.c.l.b16 %v396
    %v701 = vunpack.c.l.b16 %v397
    %v702 = vunpack.c.h.b16 %v397
    %v703 = vunpack.c.l.b16 %v398
    %v704 = vunpack.c.l.b16 %v399
    %v705 = vunpack.c.h.b16 %v399
    %v706 = vunpack.c.l.b16 %v400
    %v707 = vunpack.c.l.b16 %v401
    %v708 = vunpack.c.h.b16 %v401
    %v709 = vunpack.c.l.b16 %v402
    %v710 = vunpack.c.l.b16 %v403
    %v711 = vunpack.c.h.b16 %v403
    %v712 = vunpack.c.l.b16 %v404
    %v713 = vunpack.c.l.b16 %v405
    %v714 = vunpack.c.h.b16 %v405
    %v715 = vunpack.c.l.b16 %v406
    %v716 = vunpack.c.l.b16 %v407
    %v717 = vunpack.c.h.b16 %v407
    %v718 = vunpack.c.l.b16 %v408
    %v719 = vunpack.c.l.b16 %v409
    %v720 = vunpack.c.h.b16 %v409
    %v721 = vunpack.c.l.b16 %v410
    %v722 = vunpack.c.l.b16 %v411
    %v723 = vunpack.c.h.b16 %v411
    %v724 = vunpack.c.l.b16 %v412
    %v725 = vunpack.c.l.b16 %v413
    %v726 = vunpack.c.h.b16 %v413
    %v727 = vunpack.c.l.b16 %v414
    %v728 = vunpack.c.l.b16 %v415
    %v729 = vunpack.c.h.b16 %v415
    %v730 = vunpack.c.l.b16 %v416
    %v731 = vunpack.c.l.b16 %v417
    %v732 = vunpack.c.h.b16 %v417
    %v733 = vunpack.c.l.b16 %v418
    %v734 = vunpack.c.l.b16 %v419
    %v735 = vunpack.c.h.b16 %v419
    %v736 = vunpack.c.l.b16 %v420
    %v737 = vunpack.c.l.b16 %v421
    %v738 = vunpack.c.h.b16 %v421
    %v739 = vunpack.c.l.b16 %v422
    %v740 = vunpack.c.l.b16 %v423
    %v741 = vunpack.c.h.b16 %v423
    %v742 = vunpack.c.l.b16 %v424
    %v743 = vunpack.c.l.b16 %v425
    %v744 = vunpack.c.h.b16 %v425
    %v745 = vunpack.c.l.b16 %v426
    %v746 = vunpack.c.l.b16 %v427
    %v747 = vunpack.c.h.b16 %v427
    %v748 = vunpack.c.l.b16 %v428
    %v749 = vunpack.c.l.b16 %v429
    %v750 = vunpack.c.h.b16 %v429
    %v751 = vunpack.c.l.b16 %v430
    %v752 = vunpack.c.l.b16 %v431
    %v753 = vunpack.c.h.b16 %v431
    %v754 = vunpack.c.l.b16 %v432
    %v755 = vunpack.c.l.b16 %v433
    %v756 = vunpack.c.h.b16 %v433
    %v757 = vunpack.c.l.b16 %v434
    %v758 = vunpack.c.l.b16 %v435
    %v759 = vunpack.c.h.b16 %v435
    %v760 = vunpack.c.l.b16 %v436
    %v761 = vunpack.c.l.b16 %v437
    %v762 = vunpack.c.h.b16 %v437
    %v763 = vunpack.c.l.b16 %v438
    %v764 = vunpack.c.l.b16 %v439
    %v765 = vunpack.c.h.b16 %v439
    %v766 = vunpack.c.l.b16 %v440
    %v767 = vunpack.c.l.b16 %v441
    %v768 = vunpack.c.h.b16 %v441
    %v769 = vunpack.c.l.b16 %v442
    %v770 = vunpack.c.l.b16 %v443
    %v771 = vunpack.c.h.b16 %v443
    %v772 = vunpack.c.l.b16 %v444
    %v773 = vunpack.c.l.b16 %v445
    %v774 = vunpack.c.h.b16 %v445
    %v775 = vunpack.c.l.b16 %v446
    %v776 = vunpack.c.l.b16 %v447
    %v777 = vunpack.c.h.b16 %v447
    %v778 = vunpack.c.l.b16 %v448
    %v779 = vunpack.c.l.b16 %v449
    %v780 = vunpack.c.h.b16 %v449
    %v781 = vunpack.c.l.b16 %v450
    %v782 = vunpack.c.l.b16 %v451
    %v783 = vunpack.c.h.b16 %v451
    %v784 = vunpack.c.l.b16 %v452
    %v785 = vunpack.c.l.b16 %v453
    %v786 = vunpack.c.h.b16 %v453
    %v787 = vunpack.c.l.b16 %v454
    %v788 = vunpack.c.l.b16 %v455
    %v789 = vunpack.c.h.b16 %v455
    %v790 = vunpack.c.l.b16 %v456
    %v791 = vunpack.c.l.b16 %v457
    %v792 = vunpack.c.h.b16 %v457
    %v793 = vunpack.c.l.b16 %v458
    %v794 = vunpack.c.l.b16 %v459
    %v795 = vunpack.c.h.b16 %v459
    %v796 = vunpack.c.l.b16 %v460
    %v797 = vunpack.c.l.b16 %v461
    %v798 = vunpack.c.h.b16 %v461
    %v799 = vunpack.c.l.b16 %v462
    %v800 = vpack.c.b16 %v611, %v608
    %v801 = vpack.c.b16 %v612, %v609
    %v802 = vpack.c.b16 %v613, %v610
    %v803 = vpack.c.b16 %v617, %v614
    %v804 = vpack.c.b16 %v618, %v615
    %v805 = vpack.c.b16 %v619, %v616
    %v806 = vpack.c.b16 %v623, %v620
    %v807 = vpack.c.b16 %v624, %v621
    %v808 = vpack.c.b16 %v625, %v622
    %v809 = vpack.c.b16 %v629, %v626
    %v810 = vpack.c.b16 %v630, %v627
    %v811 = vpack.c.b16 %v631, %v628
    %v812 = vpack.c.b16 %v635, %v632
    %v813 = vpack.c.b16 %v636, %v633
    %v814 = vpack.c.b16 %v637, %v634
    %v815 = vpack.c.b16 %v641, %v638
    %v816 = vpack.c.b16 %v642, %v639
    %v817 = vpack.c.b16 %v643, %v640
    %v818 = vpack.c.b16 %v647, %v644
    %v819 = vpack.c.b16 %v648, %v645
    %v820 = vpack.c.b16 %v649, %v646
    %v821 = vpack.c.b16 %v653, %v650
    %v822 = vpack.c.b16 %v654, %v651
    %v823 = vpack.c.b16 %v655, %v652
    %v824 = vpack.c.b16 %v659, %v656
    %v825 = vpack.c.b16 %v660, %v657
    %v826 = vpack.c.b16 %v661, %v658
    %v827 = vpack.c.b16 %v665, %v662
    %v828 = vpack.c.b16 %v666, %v663
    %v829 = vpack.c.b16 %v667, %v664
    %v830 = vpack.c.b16 %v671, %v668
    %v831 = vpack.c.b16 %v672, %v669
    %v832 = vpack.c.b16 %v673, %v670
    %v833 = vpack.c.b16 %v677, %v674
    %v834 = vpack.c.b16 %v678, %v675
    %v835 = vpack.c.b16 %v679, %v676
    %v836 = vpack.c.b16 %v683, %v680
    %v837 = vpack.c.b16 %v684, %v681
    %v838 = vpack.c.b16 %v685, %v682
    %v839 = vpack.c.b16 %v689, %v686
    %v840 = vpack.c.b16 %v690, %v687
    %v841 = vpack.c.b16 %v691, %v688
    %v842 = vpack.c.b16 %v695, %v692
    %v843 = vpack.c.b16 %v696, %v693
    %v844 = vpack.c.b16 %v697, %v694
    %v845 = vpack.c.b16 %v701, %v698
    %v846 = vpack.c.b16 %v702, %v699
    %v847 = vpack.c.b16 %v703, %v700
    %v848 = vpack.c.b16 %v707, %v704
    %v849 = vpack.c.b16 %v708, %v705
    %v850 = vpack.c.b16 %v709, %v706
    %v851 = vpack.c.b16 %v713, %v710
    %v852 = vpack.c.b16 %v714, %v711
    %v853 = vpack.c.b16 %v715, %v712
    %v854 = vpack.c.b16 %v719, %v716
    %v855 = vpack.c.b16 %v720, %v717
    %v856 = vpack.c.b16 %v721, %v718
    %v857 = vpack.c.b16 %v725, %v722
    %v858 = vpack.c.b16 %v726, %v723
    %v859 = vpack.c.b16 %v727, %v724
    %v860 = vpack.c.b16 %v731, %v728
    %v861 = vpack.c.b16 %v732, %v729
    %v862 = vpack.c.b16 %v733, %v730
    %v863 = vpack.c.b16 %v737, %v734
    %v864 = vpack.c.b16 %v738, %v735
    %v865 = vpack.c.b16 %v739, %v736
    %v866 = vpack.c.b16 %v743, %v740
    %v867 = vpack.c.b16 %v744, %v741
    %v868 = vpack.c.b16 %v745, %v742
    %v869 = vpack.c.b16 %v749, %v746
    %v870 = vpack.c.b16 %v750, %v747
    %v871 = vpack.c.b16 %v751, %v748
    %v872 = vpack.c.b16 %v755, %v752
    %v873 = vpack.c.b16 %v756, %v753
    %v874 = vpack.c.b16 %v757, %v754
    %v875 = vpack.c.b16 %v761, %v758
    %v876 = vpack.c.b16 %v762, %v759
    %v877 = vpack.c.b16 %v763, %v760
    %v878 = vpack.c.b16 %v767, %v764
    %v879 = vpack.c.b16 %v768, %v765
    %v880 = vpack.c.b16 %v769, %v766
    %v881 = vpack.c.b16 %v773, %v770
    %v882 = vpack.c.b16 %v774, %v771
    %v883 = vpack.c.b16 %v775, %v772
    %v884 = vpack.c.b16 %v779, %v776
    %v885 = vpack.c.b16 %v780, %v777
    %v886 = vpack.c.b16 %v781, %v778
    %v887 = vpack.c.b16 %v785, %v782
    %v888 = vpack.c.b16 %v786, %v783
    %v889 = vpack.c.b16 %v787, %v784
    %v890 = vpack.c.b16 %v791, %v788
    %v891 = vpack.c.b16 %v792, %v789
    %v892 = vpack.c.b16 %v793, %v790
    %v893 = vpack.c.b16 %v797, %v794
    %v894 = vpack.c.b16 %v798, %v795
    %v895 = vpack.c.b16 %v799, %v796
    %992 = vmatprep.subr.bf16.mxu0 %v822
    %993 = vmatpush1.bf16.msra.mxu0 %v821
    %994 = vmatprep.subr.bf16.mxu0 %v819
    %995 = vmatpush1.bf16.msra.mxu0 %v818
    %996 = vmatprep.subr.bf16.mxu0 %v816
    %997 = vmatpush1.bf16.msra.mxu0 %v815
    %998 = vmatprep.subr.bf16.mxu0 %v813
    %999 = vmatpush1.bf16.msra.mxu0 %v812
    %1000 = vmatprep.subr.bf16.mxu0 %v810
    %1001 = vmatpush1.bf16.msra.mxu0 %v809
    %1002 = vmatprep.subr.bf16.mxu0 %v807
    %1003 = vmatpush1.bf16.msra.mxu0 %v806
    %1004 = vmatprep.subr.bf16.mxu0 %v804
    %1005 = vmatpush1.bf16.msra.mxu0 %v803
    %1006 = vmatprep.subr.bf16.mxu0 %v801
    %1007 = vmatpush1.bf16.msra.mxu0 %v800
    %1008 = vmatprep.subr.bf16.mxu0 %v846
    %1009 = vmatpush2.bf16.msra.mxu0 %v845
    %1010 = vmatprep.subr.bf16.mxu0 %v843
    %1011 = vmatpush2.bf16.msra.mxu0 %v842
    %1012 = vmatprep.subr.bf16.mxu0 %v840
    %1013 = vmatpush2.bf16.msra.mxu0 %v839
    %1014 = vmatprep.subr.bf16.mxu0 %v837
    %1015 = vmatpush2.bf16.msra.mxu0 %v836
    %1016 = vmatprep.subr.bf16.mxu0 %v834
    %1017 = vmatpush2.bf16.msra.mxu0 %v833
    %1018 = vmatprep.subr.bf16.mxu0 %v831
    %1019 = vmatpush2.bf16.msra.mxu0 %v830
    %1020 = vmatprep.subr.bf16.mxu0 %v828
    %1021 = vmatpush2.bf16.msra.mxu0 %v827
    %1022 = vmatprep.subr.bf16.mxu0 %v825
    %1023 = vmatpush2.bf16.msra.mxu0 %v824
    %1024 = vmatprep.mubr.bf16.mxu0 %v332
    %1025 = vmatmul.mubr.bf16.gmra.mxu0 %v331
    %v1026 = vpop.f32.mrf.mxu0
    %v1027 = vadd.f32 %v468, %v1026
    %v1028 = vpop.f32.mrf.mxu0
    %v1029 = vadd.f32 %v472, %v1028
    %v1030 = vpop.f32.mrf.mxu0
    %v1031 = vpop.f32.mrf.mxu0
    %1032 = vdwg.mxu0
    %1033 = vmatprep.subr.bf16.mxu0 %v870
    %1034 = vmatpush1.bf16.msra.mxu0 %v869
    %1035 = vmatprep.subr.bf16.mxu0 %v867
    %1036 = vmatpush1.bf16.msra.mxu0 %v866
    %1037 = vmatprep.subr.bf16.mxu0 %v864
    %1038 = vmatpush1.bf16.msra.mxu0 %v863
    %1039 = vmatprep.subr.bf16.mxu0 %v861
    %1040 = vmatpush1.bf16.msra.mxu0 %v860
    %1041 = vmatprep.subr.bf16.mxu0 %v858
    %1042 = vmatpush1.bf16.msra.mxu0 %v857
    %1043 = vmatprep.subr.bf16.mxu0 %v855
    %1044 = vmatpush1.bf16.msra.mxu0 %v854
    %1045 = vmatprep.subr.bf16.mxu0 %v852
    %1046 = vmatpush1.bf16.msra.mxu0 %v851
    %1047 = vmatprep.subr.bf16.mxu0 %v849
    %1048 = vmatpush1.bf16.msra.mxu0 %v848
    %1049 = vmatprep.subr.bf16.mxu0 %v894
    %1050 = vmatpush2.bf16.msra.mxu0 %v893
    %1051 = vmatprep.subr.bf16.mxu0 %v891
    %1052 = vmatpush2.bf16.msra.mxu0 %v890
    %1053 = vmatprep.subr.bf16.mxu0 %v888
    %1054 = vmatpush2.bf16.msra.mxu0 %v887
    %1055 = vmatprep.subr.bf16.mxu0 %v885
    %1056 = vmatpush2.bf16.msra.mxu0 %v884
    %1057 = vmatprep.subr.bf16.mxu0 %v882
    %1058 = vmatpush2.bf16.msra.mxu0 %v881
    %1059 = vmatprep.subr.bf16.mxu0 %v879
    %1060 = vmatpush2.bf16.msra.mxu0 %v878
    %1061 = vmatprep.subr.bf16.mxu0 %v876
    %1062 = vmatpush2.bf16.msra.mxu0 %v875
    %1063 = vmatprep.subr.bf16.mxu0 %v873
    %1064 = vmatpush2.bf16.msra.mxu0 %v872
    %1065 = vmatprep.mubr.bf16.mxu0 %v334
    %1066 = vmatmul.mubr.bf16.gmra.mxu0 %v333
    %v1067 = vpop.f32.mrf.mxu0
    %v1068 = vadd.f32 %v1027, %v1067
    %v1069 = vpop.f32.mrf.mxu0
    %v1070 = vadd.f32 %v1029, %v1069
    %v1071 = vpop.f32.mrf.mxu0
    %v1072 = vpop.f32.mrf.mxu0
    %1073 = vdwg.mxu0
    %1074 = vmatprep.subr.bf16.mxu0 0
    %1075 = vmatpush1.bf16.msra.mxu0 %v823
    %1076 = vmatprep.subr.bf16.mxu0 0
    %1077 = vmatpush1.bf16.msra.mxu0 %v820
    %1078 = vmatprep.subr.bf16.mxu0 0
    %1079 = vmatpush1.bf16.msra.mxu0 %v817
    %1080 = vmatprep.subr.bf16.mxu0 0
    %1081 = vmatpush1.bf16.msra.mxu0 %v814
    %1082 = vmatprep.subr.bf16.mxu0 0
    %1083 = vmatpush1.bf16.msra.mxu0 %v811
    %1084 = vmatprep.subr.bf16.mxu0 0
    %1085 = vmatpush1.bf16.msra.mxu0 %v808
    %1086 = vmatprep.subr.bf16.mxu0 0
    %1087 = vmatpush1.bf16.msra.mxu0 %v805
    %1088 = vmatprep.subr.bf16.mxu0 0
    %1089 = vmatpush1.bf16.msra.mxu0 %v802
    %1090 = vmatprep.subr.bf16.mxu0 0
    %1091 = vmatpush2.bf16.msra.mxu0 %v847
    %1092 = vmatprep.subr.bf16.mxu0 0
    %1093 = vmatpush2.bf16.msra.mxu0 %v844
    %1094 = vmatprep.subr.bf16.mxu0 0
    %1095 = vmatpush2.bf16.msra.mxu0 %v841
    %1096 = vmatprep.subr.bf16.mxu0 0
    %1097 = vmatpush2.bf16.msra.mxu0 %v838
    %1098 = vmatprep.subr.bf16.mxu0 0
    %1099 = vmatpush2.bf16.msra.mxu0 %v835
    %1100 = vmatprep.subr.bf16.mxu0 0
    %1101 = vmatpush2.bf16.msra.mxu0 %v832
    %1102 = vmatprep.subr.bf16.mxu0 0
    %1103 = vmatpush2.bf16.msra.mxu0 %v829
    %1104 = vmatprep.subr.bf16.mxu0 0
    %1105 = vmatpush2.bf16.msra.mxu0 %v826
    %1106 = vmatprep.mubr.bf16.mxu0 %v332
    %1107 = vmatmul.mubr.bf16.gmra.mxu0 %v331
    %v1108 = vpop.f32.mrf.mxu0
    %v1109 = vadd.f32 %v476, %v1108
    %v1110 = vpop.f32.mrf.mxu0
    %v1111 = vpop.f32.mrf.mxu0
    %v1112 = vpop.f32.mrf.mxu0
    %1113 = vdwg.mxu0
    %1114 = vmatprep.subr.bf16.mxu0 0
    %1115 = vmatpush1.bf16.msra.mxu0 %v871
    %1116 = vmatprep.subr.bf16.mxu0 0
    %1117 = vmatpush1.bf16.msra.mxu0 %v868
    %1118 = vmatprep.subr.bf16.mxu0 0
    %1119 = vmatpush1.bf16.msra.mxu0 %v865
    %1120 = vmatprep.subr.bf16.mxu0 0
    %1121 = vmatpush1.bf16.msra.mxu0 %v862
    %1122 = vmatprep.subr.bf16.mxu0 0
    %1123 = vmatpush1.bf16.msra.mxu0 %v859
    %1124 = vmatprep.subr.bf16.mxu0 0
    %1125 = vmatpush1.bf16.msra.mxu0 %v856
    %1126 = vmatprep.subr.bf16.mxu0 0
    %1127 = vmatpush1.bf16.msra.mxu0 %v853
    %1128 = vmatprep.subr.bf16.mxu0 0
    %1129 = vmatpush1.bf16.msra.mxu0 %v850
    %1130 = vmatprep.subr.bf16.mxu0 0
    %1131 = vmatpush2.bf16.msra.mxu0 %v895
    %1132 = vmatprep.subr.bf16.mxu0 0
    %1133 = vmatpush2.bf16.msra.mxu0 %v892
    %1134 = vmatprep.subr.bf16.mxu0 0
    %1135 = vmatpush2.bf16.msra.mxu0 %v889
    %1136 = vmatprep.subr.bf16.mxu0 0
    %1137 = vmatpush2.bf16.msra.mxu0 %v886
    %1138 = vmatprep.subr.bf16.mxu0 0
    %1139 = vmatpush2.bf16.msra.mxu0 %v883
    %1140 = vmatprep.subr.bf16.mxu0 0
    %1141 = vmatpush2.bf16.msra.mxu0 %v880
    %1142 = vmatprep.subr.bf16.mxu0 0
    %1143 = vmatpush2.bf16.msra.mxu0 %v877
    %1144 = vmatprep.subr.bf16.mxu0 0
    %1145 = vmatpush2.bf16.msra.mxu0 %v874
    %1146 = vmatprep.mubr.bf16.mxu0 %v334
    %1147 = vmatmul.mubr.bf16.gmra.mxu0 %v333
    %v1148 = vpop.f32.mrf.mxu0
    %v1149 = vadd.f32 %v1109, %v1148
    %v1150 = vpop.f32.mrf.mxu0
    %v1151 = vpop.f32.mrf.mxu0
    %v1152 = vpop.f32.mrf.mxu0
    %1153 = vdwg.mxu0
    %v1154 = vmax.f32 %v1068, 0.0
    %v1155 = vmax.f32 %v1070, 0.0
    %v1156 = vmax.f32 %v1149, 0.0
    %v1157 = vld [vmem:[%s7] sm:$0x7]
    %v1159 = vlaneseq
    %v1160 = vshrl.u32 %v1159, 7
    %v1161 = vsub.s32 0, %v1160
    %v1162 = vrot.slane %v1157, %v1161
    %v1163 = vlaneseq
    %v1164 = vshrl.u32 %v1163, 7
    %v1165 = vsub.s32 1, %v1164
    %v1166 = vrot.slane %v1157, %v1165
    %v1167 = vlaneseq
    %v1168 = vshrl.u32 %v1167, 7
    %v1169 = vsub.s32 2, %v1168
    %v1170 = vrot.slane %v1157, %v1169
    %v1174 = vmul.f32 %v1154, %v1162
    %v1175 = vmul.f32 %v1155, %v1166
    %v1176 = vmul.f32 %v1156, %v1170
    %v1177 = vadd.f32 %v1174, %v1175
    %v1178 = vadd.f32 %v1177, %v1176
    %1179 = vadd.xlane.f32.xlu0 %v1178
    %v1180 = vpop.xlane.xlu0 %1179
    %v1181 = vld [vmem:[#allocation2] sm:$0x1]
    %v1183 = vlaneseq
    %v1184 = vshrl.u32 %v1183, 7
    %v1185 = vsub.s32 0, %v1184
    %v1186 = vrot.slane %v1181, %v1185
    %v1188 = vadd.f32 %v1180, %v1186
    %vm1189 = vcmask 7168
    %1190 = vst.msk [vmem:[%s9] sm:$0xff] %vm1189, %v1188
    // Predicated region
    $region46: #{tpu_custom_call.1} parent=1 // pred_check
      _
    $region47: #{tpu_custom_call.1} parent=1 // pred_check_branch
      %1192 = sbr.rel (0) target = $region49
    $region48: #{tpu_custom_call.1} parent=1 // pred_region
      _
    $region49: #{tpu_custom_call.1} parent=1 // pred_fallthru
      _
    // Predicated region
    $region50: #{tpu_custom_call.1} parent=1 // pred_check
      _
    $region51: #{tpu_custom_call.1} parent=1 // pred_check_branch
      %1194 = sbr.rel (0) target = $region53
    $region52: #{tpu_custom_call.1} parent=1 // pred_region
      _
    $region53: #{tpu_custom_call.1} parent=1 // pred_fallthru
      _
    %1195 = vsyncpa [#allocation4], 1
    %1196 = vsyncpa [#allocation6], 1

</llo_original>
